<compile_context>
chip_gen: v7x
topology: tpu7x:2x2x1
jax: 0.10.0
libtpu: 0.0.40
codegen_flags: <defaults>
</compile_context>

<pallas_src>
import functools

import jax
import jax.numpy as jnp
from jax import lax
from jax.experimental import pallas as pl
from jax.experimental.pallas import tpu as pltpu


def _conv_stats_kernel(x_ref, w_ref, y_ref, stats_ref, *, K, S, TH, NH):
    """Fused depthwise+pointwise conv row-tile + per-tile BatchNorm partials.

    x_ref:     (1, H_pad, KP)        packed, zero-padded input (one batch elem)
    w_ref:     (K, KP, WOCO)         combined dw*pw banded weights (K-dim padded)
    y_ref:     (1, TH, WOCO)         packed conv-output row tile
    stats_ref: (1, 1, 2, WOCO)       this tile's [row-sum ; row-sum-of-squares]
    """
    woco = y_ref.shape[-1]
    # Static slice start when there is a single row tile (the common small-H
    # case); otherwise offset by the row-tile grid index.
    h0 = 0 if NH == 1 else pl.program_id(1) * (TH * S)

    acc = jnp.zeros((TH, woco), jnp.float32)
    for kh in range(K):                          # unrolled: K MXU matmuls
        if S == 1:
            rows = x_ref[0, pl.ds(h0 + kh, TH), :]              # (TH, KP)
        else:
            # TODO(synk): stride>1 strided ref load is unexercised below.
            rows = x_ref[0, pl.ds(h0 + kh, TH, stride=S), :]
        acc = acc + jnp.dot(rows, w_ref[kh], preferred_element_type=jnp.float32)

    y_ref[0] = acc.astype(y_ref.dtype)

    # Lane-dense BN partial statistics for this tile (written once per tile;
    # the (wo, co) -> co fold and cross-batch reduction happen in the wrapper).
    stats_ref[0, 0, 0:1, :] = jnp.sum(acc, axis=0, keepdims=True)
    stats_ref[0, 0, 1:2, :] = jnp.sum(acc * acc, axis=0, keepdims=True)


def _bn_act_kernel(y_ref, scale_ref, shift_ref, o_ref):
    """Folded BatchNorm affine (one FMA) + PhotonicSigmoid on a packed tile."""
    yh = y_ref[...] * scale_ref[...] + shift_ref[...]
    t = jnp.exp((yh - 0.145) * (1.0 / 0.073))                   # EUP
    o_ref[...] = (1.005 + (0.06 - 1.005) / (1.0 + t)).astype(o_ref.dtype)


def _combined_weights(w_dw, w_pw, *, W_pad, W_out, stride):
    """Banded combined weight, shape (K, W_pad*C_in, W_out*C_out)."""
    C_in, _, K, _ = w_dw.shape
    wdw = jnp.transpose(w_dw[:, 0, :, :], (1, 2, 0))            # (K, K, C_in)
    wpw = jnp.transpose(w_pw[:, :, 0, 0], (1, 0))               # (C_in, C_out)
    comb = wdw[:, :, :, None] * wpw[None, None, :, :]           # (K, K, C_in, C_out)

    kw = jnp.arange(W_pad)[:, None] - jnp.arange(W_out)[None, :] * stride
    valid = (kw >= 0) & (kw < K)                                # (W_pad, W_out)
    band = comb[:, jnp.clip(kw, 0, K - 1)]                      # (K, W_pad, W_out, C_in, C_out)
    band = band * valid[None, :, :, None, None].astype(comb.dtype)
    band = jnp.transpose(band, (0, 1, 3, 2, 4))                 # (K, W_pad, C_in, W_out, C_out)
    return band.reshape(K, W_pad * band.shape[2], W_out * band.shape[4])


def sepconv_forward(x_nchw, w_dw, w_pw, gamma, beta, *, stride, padding, eps=1e-5):
    """x_nchw: (N, C_in, H, W); w_dw: (C_in, 1, K, K); w_pw: (C_out, C_in, 1, 1)."""
    N, C_in, H, W = x_nchw.shape
    C_out = w_pw.shape[0]
    K = w_dw.shape[-1]
    H_pad, W_pad = H + 2 * padding, W + 2 * padding
    H_out = (H_pad - K) // stride + 1
    W_out = (W_pad - K) // stride + 1
    woco = W_out * C_out
    kin = W_pad * C_in
    KP = ((kin + 127) // 128) * 128                              # contraction dim -> lane multiple

    # ---- layout plumbing (plain XLA, outside the kernels) ----
    x = jnp.transpose(x_nchw, (0, 2, 3, 1)).astype(jnp.float32)  # NHWC
    x = jnp.pad(x, ((0, 0), (padding, padding), (padding, padding), (0, 0)))
    x_packed = x.reshape(N, H_pad, kin)
    x_packed = jnp.pad(x_packed, ((0, 0), (0, 0), (0, KP - kin)))  # zero-pad K dim

    w_comb = _combined_weights(w_dw.astype(jnp.float32), w_pw.astype(jnp.float32),
                               W_pad=W_pad, W_out=W_out, stride=stride)
    w_comb = jnp.pad(w_comb, ((0, 0), (0, KP - kin), (0, 0)))    # (K, KP, woco)

    # Row tile: whole output height per step at these sizes; cap near 256 rows
    # (largest multiple of 8 that divides H_out) for realistic H.
    if H_out <= 256:
        TH = H_out
    else:
        TH = next((t for t in range(256, 7, -8) if H_out % t == 0), H_out)
    num_h = H_out // TH
    grid = (N, num_h)

    kernel1 = functools.partial(_conv_stats_kernel, K=K, S=stride, TH=TH, NH=num_h)
    y_packed, stats = pl.pallas_call(
        kernel1,
        grid=grid,
        out_shape=(jax.ShapeDtypeStruct((N, H_out, woco), jnp.float32),
                   jax.ShapeDtypeStruct((N, num_h, 2, woco), jnp.float32)),
        in_specs=[
            pl.BlockSpec((1, H_pad, KP), lambda n, h: (n, 0, 0)),
            pl.BlockSpec((K, KP, woco), lambda n, h: (0, 0, 0)),
        ],
        out_specs=(
            pl.BlockSpec((1, TH, woco), lambda n, h: (n, h, 0)),
            pl.BlockSpec((1, 1, 2, woco), lambda n, h: (n, h, 0, 0)),
        ),
        compiler_params=pltpu.CompilerParams(
            dimension_semantics=("parallel", "parallel")),
    )(x_packed, w_comb)

    # ---- global BN batch stats -> folded scale/shift (tiny, plain XLA) ----
    cnt = jnp.float32(N * H_out * W_out)
    stats_c = stats.reshape(N, num_h, 2, W_out, C_out).sum(axis=(0, 1, 3))  # (2, C_out)
    mean = stats_c[0] / cnt
    var = jnp.maximum(stats_c[1] / cnt - mean * mean, 0.0)       # biased batch var
    scale = gamma.astype(jnp.float32) * lax.rsqrt(var + eps)
    shift = beta.astype(jnp.float32) - mean * scale
    scale_t = jnp.tile(scale, W_out).reshape(1, 1, woco)         # lane layout wo*C_out+co
    shift_t = jnp.tile(shift, W_out).reshape(1, 1, woco)

    out_packed = pl.pallas_call(
        _bn_act_kernel,
        grid=grid,
        out_shape=jax.ShapeDtypeStruct((N, H_out, woco), jnp.float32),
        in_specs=[
            pl.BlockSpec((1, TH, woco), lambda n, h: (n, h, 0)),
            pl.BlockSpec((1, 1, woco), lambda n, h: (0, 0, 0)),
            pl.BlockSpec((1, 1, woco), lambda n, h: (0, 0, 0)),
        ],
        out_specs=pl.BlockSpec((1, TH, woco), lambda n, h: (n, h, 0)),
        compiler_params=pltpu.CompilerParams(
            dimension_semantics=("parallel", "parallel")),
    )(y_packed, scale_t, shift_t)

    out = out_packed.reshape(N, H_out, W_out, C_out)
    # TODO(synk): fold this NCHW transpose into the BN/act kernel's out_spec
    # (XLU transpose) if the consumer needs NCHW in HBM at large H*W.
    return jnp.transpose(out, (0, 3, 1, 2))                      # -> NCHW


def sepconv_reference(x, w_dw, w_pw, gamma, beta, *, stride, padding):
    """Pure-JAX reference mirroring the PyTorch module (training-mode BN)."""
    C_in = x.shape[1]
    dw = lax.conv_general_dilated(
        x, w_dw, window_strides=(stride, stride),
        padding=[(padding, padding), (padding, padding)],
        feature_group_count=C_in,
        dimension_numbers=("NCHW", "OIHW", "NCHW"))
    pw = lax.conv_general_dilated(
        dw, w_pw, window_strides=(1, 1), padding=[(0, 0), (0, 0)],
        dimension_numbers=("NCHW", "OIHW", "NCHW"))
    mean = jnp.mean(pw, axis=(0, 2, 3), keepdims=True)
    var = jnp.mean((pw - mean) ** 2, axis=(0, 2, 3), keepdims=True)
    yh = (pw - mean) / jnp.sqrt(var + 1e-5)
    yh = yh * gamma.reshape(1, -1, 1, 1) + beta.reshape(1, -1, 1, 1)
    tmp = jnp.exp((yh - 0.145) / 0.073)
    return 1.005 + (0.06 - 1.005) / (1.0 + tmp)


if __name__ == "__main__":
    key = jax.random.PRNGKey(0)
    k1, k2, k3, k4, k5 = jax.random.split(key, 5)

    # SepConv(C_in=4, C_out=8, kernel=3, stride=1, pad=1) on a small input.
    N, C_in, C_out, H, W = 2, 4, 8, 16, 16
    K, stride, padding = 3, 1, 1

    x = jax.random.normal(k1, (N, C_in, H, W), jnp.float32)
    w_dw = jax.random.normal(k2, (C_in, 1, K, K), jnp.float32) * (1.0 / K)
    w_pw = jax.random.normal(k3, (C_out, C_in, 1, 1), jnp.float32) * (1.0 / C_in ** 0.5)
    gamma = 1.0 + 0.1 * jax.random.normal(k4, (C_out,), jnp.float32)
    beta = 0.05 * jax.random.normal(k5, (C_out,), jnp.float32)

    fwd = jax.jit(functools.partial(sepconv_forward, stride=stride, padding=padding))
    out = jax.block_until_ready(fwd(x, w_dw, w_pw, gamma, beta))

    ref = sepconv_reference(x, w_dw, w_pw, gamma, beta, stride=stride, padding=padding)
    assert out.shape == ref.shape == (N, C_out, H, W)
    max_err = float(jnp.max(jnp.abs(out - ref)))
    assert max_err < 2e-3, f"max abs err {max_err}"
    print("KERNEL_OK")
</pallas_src>

<mosaic_0001>
module attributes {stable_mosaic.version = 11 : i64} {
  func.func @_conv_stats_kernel(%arg0: i32, %arg1: i32, %arg2: memref<1x18x128xf32, #tpu.memory_space<vmem>>, %arg3: memref<3x128x128xf32, #tpu.memory_space<vmem>>, %arg4: memref<1x16x128xf32, #tpu.memory_space<vmem>>, %arg5: memref<1x1x2x128xf32, #tpu.memory_space<vmem>>) attributes {dimension_semantics = [#tpu.dimension_semantics<parallel>, #tpu.dimension_semantics<parallel>], iteration_bounds = array<i64: 2, 1>, scalar_prefetch = 0 : i64, scratch_operands = 0 : i64, tpu.core_type = #tpu.core_type<tc>, window_params = [{transform_indices = @transform_0, window_bounds = array<i64: 1, 18, 128>}, {pipeline_mode = #tpu.pipeline_mode<synchronous>, transform_indices = @transform_1, window_bounds = array<i64: 3, 128, 128>}, {transform_indices = @transform_2, window_bounds = array<i64: 1, 16, 128>}, {transform_indices = @transform_3, window_bounds = array<i64: 1, 1, 2, 128>}]} {
    %cst = arith.constant 0.000000e+00 : f32
    %0 = vector.broadcast %cst : f32 to vector<16x128xf32>
    %c0 = arith.constant 0 : index
    %c0_0 = arith.constant 0 : index
    %c0_1 = arith.constant 0 : index
    %1 = vector.load %arg2[%c0, %c0_0, %c0_1] : memref<1x18x128xf32, #tpu.memory_space<vmem>>, vector<1x16x128xf32>
    %2 = vector.shape_cast %1 : vector<1x16x128xf32> to vector<16x128xf32>
    %c0_2 = arith.constant 0 : index
    %c0_3 = arith.constant 0 : index
    %c0_4 = arith.constant 0 : index
    %3 = vector.load %arg3[%c0_2, %c0_3, %c0_4] : memref<3x128x128xf32, #tpu.memory_space<vmem>>, vector<1x128x128xf32>
    %4 = vector.shape_cast %3 : vector<1x128x128xf32> to vector<128x128xf32>
    %cst_5 = arith.constant dense<0.000000e+00> : vector<16x128xf32>
    %5 = tpu.matmul %2, %4, %cst_5 {dimension_numbers = #tpu.dot_dimension_numbers<[1], [0], [0], [1], [0, 0, 1, 1], [], []>} : vector<16x128xf32>, vector<128x128xf32>, vector<16x128xf32> -> vector<16x128xf32>
    %6 = arith.addf %0, %5 : vector<16x128xf32>
    %c0_6 = arith.constant 0 : index
    %c1 = arith.constant 1 : index
    %c0_7 = arith.constant 0 : index
    %7 = vector.load %arg2[%c0_6, %c1, %c0_7] : memref<1x18x128xf32, #tpu.memory_space<vmem>>, vector<1x16x128xf32>
    %8 = vector.shape_cast %7 : vector<1x16x128xf32> to vector<16x128xf32>
    %c1_8 = arith.constant 1 : index
    %c0_9 = arith.constant 0 : index
    %c0_10 = arith.constant 0 : index
    %9 = vector.load %arg3[%c1_8, %c0_9, %c0_10] : memref<3x128x128xf32, #tpu.memory_space<vmem>>, vector<1x128x128xf32>
    %10 = vector.shape_cast %9 : vector<1x128x128xf32> to vector<128x128xf32>
    %cst_11 = arith.constant dense<0.000000e+00> : vector<16x128xf32>
    %11 = tpu.matmul %8, %10, %cst_11 {dimension_numbers = #tpu.dot_dimension_numbers<[1], [0], [0], [1], [0, 0, 1, 1], [], []>} : vector<16x128xf32>, vector<128x128xf32>, vector<16x128xf32> -> vector<16x128xf32>
    %12 = arith.addf %6, %11 : vector<16x128xf32>
    %c0_12 = arith.constant 0 : index
    %c2 = arith.constant 2 : index
    %c0_13 = arith.constant 0 : index
    %13 = vector.load %arg2[%c0_12, %c2, %c0_13] : memref<1x18x128xf32, #tpu.memory_space<vmem>>, vector<1x16x128xf32>
    %14 = vector.shape_cast %13 : vector<1x16x128xf32> to vector<16x128xf32>
    %c2_14 = arith.constant 2 : index
    %c0_15 = arith.constant 0 : index
    %c0_16 = arith.constant 0 : index
    %15 = vector.load %arg3[%c2_14, %c0_15, %c0_16] : memref<3x128x128xf32, #tpu.memory_space<vmem>>, vector<1x128x128xf32>
    %16 = vector.shape_cast %15 : vector<1x128x128xf32> to vector<128x128xf32>
    %cst_17 = arith.constant dense<0.000000e+00> : vector<16x128xf32>
    %17 = tpu.matmul %14, %16, %cst_17 {dimension_numbers = #tpu.dot_dimension_numbers<[1], [0], [0], [1], [0, 0, 1, 1], [], []>} : vector<16x128xf32>, vector<128x128xf32>, vector<16x128xf32> -> vector<16x128xf32>
    %18 = arith.addf %12, %17 : vector<16x128xf32>
    %c0_18 = arith.constant 0 : index
    %c0_19 = arith.constant 0 : index
    %c0_20 = arith.constant 0 : index
    %19 = vector.load %arg4[%c0_18, %c0_19, %c0_20] : memref<1x16x128xf32, #tpu.memory_space<vmem>>, vector<1x16x128xf32>
    %20 = vector.shape_cast %19 : vector<1x16x128xf32> to vector<16x128xf32>
    %21 = vector.shape_cast %18 : vector<16x128xf32> to vector<1x16x128xf32>
    tpu.vector_store %arg4[%c0_18, %c0_19, %c0_20], %21 {strides = array<i32>} : memref<1x16x128xf32, #tpu.memory_space<vmem>>, vector<1x16x128xf32>,
    %cst_21 = arith.constant dense<0.000000e+00> : vector<128xf32>
    %22 = vector.multi_reduction <add>, %18, %cst_21 [0] : vector<16x128xf32> to vector<128xf32>
    %23 = vector.shape_cast %22 : vector<128xf32> to vector<1x128xf32>
    %c0_22 = arith.constant 0 : index
    %c0_23 = arith.constant 0 : index
    %c0_24 = arith.constant 0 : index
    %c0_25 = arith.constant 0 : index
    %24 = vector.load %arg5[%c0_22, %c0_23, %c0_24, %c0_25] : memref<1x1x2x128xf32, #tpu.memory_space<vmem>>, vector<1x1x1x128xf32>
    %25 = vector.shape_cast %24 : vector<1x1x1x128xf32> to vector<1x128xf32>
    %26 = vector.shape_cast %23 : vector<1x128xf32> to vector<1x1x1x128xf32>
    tpu.vector_store %arg5[%c0_22, %c0_23, %c0_24, %c0_25], %26 {strides = array<i32>} : memref<1x1x2x128xf32, #tpu.memory_space<vmem>>, vector<1x1x1x128xf32>,
    %27 = arith.mulf %18, %18 : vector<16x128xf32>
    %cst_26 = arith.constant dense<0.000000e+00> : vector<128xf32>
    %28 = vector.multi_reduction <add>, %27, %cst_26 [0] : vector<16x128xf32> to vector<128xf32>
    %29 = vector.shape_cast %28 : vector<128xf32> to vector<1x128xf32>
    %c0_27 = arith.constant 0 : index
    %c0_28 = arith.constant 0 : index
    %c1_29 = arith.constant 1 : index
    %c0_30 = arith.constant 0 : index
    %30 = vector.load %arg5[%c0_27, %c0_28, %c1_29, %c0_30] : memref<1x1x2x128xf32, #tpu.memory_space<vmem>>, vector<1x1x1x128xf32>
    %31 = vector.shape_cast %30 : vector<1x1x1x128xf32> to vector<1x128xf32>
    %32 = vector.shape_cast %29 : vector<1x128xf32> to vector<1x1x1x128xf32>
    tpu.vector_store %arg5[%c0_27, %c0_28, %c1_29, %c0_30], %32 {strides = array<i32>} : memref<1x1x2x128xf32, #tpu.memory_space<vmem>>, vector<1x1x1x128xf32>,
    return
  }
  func.func @transform_0(%arg0: i32, %arg1: i32) -> (i32, i32, i32) {
    %c0_i32 = arith.constant 0 : i32
    %c0_i32_0 = arith.constant 0 : i32
    %c0_i32_1 = arith.constant 0 : i32
    return %arg0, %c0_i32, %c0_i32_0 : i32, i32, i32
  }
  func.func @transform_1(%arg0: i32, %arg1: i32) -> (i32, i32, i32) {
    %c0_i32 = arith.constant 0 : i32
    %c0_i32_0 = arith.constant 0 : i32
    %c0_i32_1 = arith.constant 0 : i32
    %c0_i32_2 = arith.constant 0 : i32
    return %c0_i32, %c0_i32_0, %c0_i32_1 : i32, i32, i32
  }
  func.func @transform_2(%arg0: i32, %arg1: i32) -> (i32, i32, i32) {
    %c0_i32 = arith.constant 0 : i32
    %c0_i32_0 = arith.constant 0 : i32
    return %arg0, %arg1, %c0_i32 : i32, i32, i32
  }
  func.func @transform_3(%arg0: i32, %arg1: i32) -> (i32, i32, i32, i32) {
    %c0_i32 = arith.constant 0 : i32
    %c0_i32_0 = arith.constant 0 : i32
    %c0_i32_1 = arith.constant 0 : i32
    return %arg0, %arg1, %c0_i32, %c0_i32_0 : i32, i32, i32, i32
  }
}

module attributes {stable_mosaic.version = 11 : i64} {
  func.func @_bn_act_kernel(%arg0: i32, %arg1: i32, %arg2: memref<1x16x128xf32, #tpu.memory_space<vmem>>, %arg3: memref<1x1x128xf32, #tpu.memory_space<vmem>>, %arg4: memref<1x1x128xf32, #tpu.memory_space<vmem>>, %arg5: memref<1x16x128xf32, #tpu.memory_space<vmem>>) attributes {dimension_semantics = [#tpu.dimension_semantics<parallel>, #tpu.dimension_semantics<parallel>], iteration_bounds = array<i64: 2, 1>, scalar_prefetch = 0 : i64, scratch_operands = 0 : i64, tpu.core_type = #tpu.core_type<tc>, window_params = [{transform_indices = @transform_0, window_bounds = array<i64: 1, 16, 128>}, {pipeline_mode = #tpu.pipeline_mode<synchronous>, transform_indices = @transform_1, window_bounds = array<i64: 1, 1, 128>}, {pipeline_mode = #tpu.pipeline_mode<synchronous>, transform_indices = @transform_2, window_bounds = array<i64: 1, 1, 128>}, {transform_indices = @transform_3, window_bounds = array<i64: 1, 16, 128>}]} {
    %c0 = arith.constant 0 : index
    %c0_0 = arith.constant 0 : index
    %c0_1 = arith.constant 0 : index
    %0 = vector.load %arg2[%c0, %c0_0, %c0_1] : memref<1x16x128xf32, #tpu.memory_space<vmem>>, vector<1x16x128xf32>
    %c0_2 = arith.constant 0 : index
    %c0_3 = arith.constant 0 : index
    %c0_4 = arith.constant 0 : index
    %1 = vector.load %arg3[%c0_2, %c0_3, %c0_4] : memref<1x1x128xf32, #tpu.memory_space<vmem>>, vector<1x1x128xf32>
    %2 = vector.broadcast %1 : vector<1x1x128xf32> to vector<1x16x128xf32>
    %3 = arith.mulf %0, %2 : vector<1x16x128xf32>
    %c0_5 = arith.constant 0 : index
    %c0_6 = arith.constant 0 : index
    %c0_7 = arith.constant 0 : index
    %4 = vector.load %arg4[%c0_5, %c0_6, %c0_7] : memref<1x1x128xf32, #tpu.memory_space<vmem>>, vector<1x1x128xf32>
    %5 = vector.broadcast %4 : vector<1x1x128xf32> to vector<1x16x128xf32>
    %6 = arith.addf %3, %5 : vector<1x16x128xf32>
    %cst = arith.constant 1.450000e-01 : f32
    %7 = vector.broadcast %cst : f32 to vector<1x16x128xf32>
    %8 = arith.subf %6, %7 : vector<1x16x128xf32>
    %cst_8 = arith.constant 13.6986303 : f32
    %9 = vector.broadcast %cst_8 : f32 to vector<1x16x128xf32>
    %10 = arith.mulf %8, %9 : vector<1x16x128xf32>
    %11 = math.exp %10 : vector<1x16x128xf32>
    %cst_9 = arith.constant 1.000000e+00 : f32
    %12 = vector.broadcast %cst_9 : f32 to vector<1x16x128xf32>
    %13 = arith.addf %12, %11 : vector<1x16x128xf32>
    %cst_10 = arith.constant -0.944999992 : f32
    %14 = vector.broadcast %cst_10 : f32 to vector<1x16x128xf32>
    %15 = arith.divf %14, %13 : vector<1x16x128xf32>
    %cst_11 = arith.constant 1.005000e+00 : f32
    %16 = vector.broadcast %cst_11 : f32 to vector<1x16x128xf32>
    %17 = arith.addf %16, %15 : vector<1x16x128xf32>
    %c0_12 = arith.constant 0 : index
    %c0_13 = arith.constant 0 : index
    %c0_14 = arith.constant 0 : index
    %18 = vector.load %arg5[%c0_12, %c0_13, %c0_14] : memref<1x16x128xf32, #tpu.memory_space<vmem>>, vector<1x16x128xf32>
    tpu.vector_store %arg5[%c0_12, %c0_13, %c0_14], %17 {strides = array<i32>} : memref<1x16x128xf32, #tpu.memory_space<vmem>>, vector<1x16x128xf32>,
    return
  }
  func.func @transform_0(%arg0: i32, %arg1: i32) -> (i32, i32, i32) {
    %c0_i32 = arith.constant 0 : i32
    %c0_i32_0 = arith.constant 0 : i32
    return %arg0, %arg1, %c0_i32 : i32, i32, i32
  }
  func.func @transform_1(%arg0: i32, %arg1: i32) -> (i32, i32, i32) {
    %c0_i32 = arith.constant 0 : i32
    %c0_i32_0 = arith.constant 0 : i32
    %c0_i32_1 = arith.constant 0 : i32
    %c0_i32_2 = arith.constant 0 : i32
    return %c0_i32, %c0_i32_0, %c0_i32_1 : i32, i32, i32
  }
  func.func @transform_2(%arg0: i32, %arg1: i32) -> (i32, i32, i32) {
    %c0_i32 = arith.constant 0 : i32
    %c0_i32_0 = arith.constant 0 : i32
    %c0_i32_1 = arith.constant 0 : i32
    %c0_i32_2 = arith.constant 0 : i32
    return %c0_i32, %c0_i32_0, %c0_i32_1 : i32, i32, i32
  }
  func.func @transform_3(%arg0: i32, %arg1: i32) -> (i32, i32, i32) {
    %c0_i32 = arith.constant 0 : i32
    %c0_i32_0 = arith.constant 0 : i32
    return %arg0, %arg1, %c0_i32 : i32, i32, i32
  }
}

</mosaic_0001>

<llo_original>
// kernel: tile.13
$region0: #{tile.13}
  #allocation0 [shape = 's32[1]{0}', space=sflag, size = 0x4, scoped, tag = 'scoped memory for tile.13']
  %s0 = inlined_call_operand.vmem [shape: f32[8], index: 0, kind: input, shape index: {}]
  %s1 = inlined_call_operand.vmem [shape: f32[16,8], index: 1, kind: output, shape index: {}]
  // Predicated region
  $region2: #{tile.13} parent=0 // pred_check
    _
  $region3: #{tile.13} parent=0 // pred_check_branch
    %3 = sbr.rel (0) target = $region5
  $region4: #{tile.13} parent=0 // pred_region
    _
  $region5: #{tile.13} parent=0 // pred_fallthru
    _
  %v4 = vld [vmem:[%s0] ss:$0 sm:$0xff]
  %5 = vst [vmem:[%s1] sm:$0xff] %v4
  %s6 = scalar_lea.vmem %s1, 8
  %7 = vst [vmem:[%s6] sm:$0xff] %v4

// kernel: tile.14
$region0: #{tile.14}
  %s0 = inlined_call_operand.vmem [shape: f32[16,8], index: 0, kind: input, shape index: {}]
  %s1 = inlined_call_operand.vmem [shape: f32[1,1,128], index: 1, kind: output, shape index: {}]
  $region1: #{tile.14} parent=0
    #allocation0 [shape = 'u8[4096]{0}', space=vmem, size = 0x1000, scoped, tag = 'scoped mem for output reshape']
    %v2 = vld [vmem:[%s0] sm:$0x1]
    %vm3 = vcmask 64512
    %4 = vst.msk [vmem:[#allocation0] sm:$0x1] %vm3, %v2
    %s5 = scalar_lea.vmem %s0, 15
    %v6 = vld [vmem:[%s5] sm:$0x1]
    %7 = vrot.lane.b32.xlu0 %v6, 120
    %v8 = vpop.permute.xlu0 %7
    %vm9 = vcmask 1048512
    %10 = vst.msk [vmem:[#allocation0] sm:$0x1] %vm9, %v8
    %s11 = scalar_lea.vmem %s0, 14
    %v12 = vld [vmem:[%s11] sm:$0x1]
    %13 = vrot.lane.b32.xlu0 %v12, 112
    %v14 = vpop.permute.xlu0 %13
    %vm15 = vcmask 982912
    %16 = vst.msk [vmem:[#allocation0] sm:$0x1] %vm15, %v14
    %s17 = scalar_lea.vmem %s0, 13
    %v18 = vld [vmem:[%s17] sm:$0x1]
    %19 = vrot.lane.b32.xlu0 %v18, 104
    %v20 = vpop.permute.xlu0 %19
    %vm21 = vcmask 917312
    %22 = vst.msk [vmem:[#allocation0] sm:$0x1] %vm21, %v20
    %s23 = scalar_lea.vmem %s0, 12
    %v24 = vld [vmem:[%s23] sm:$0x1]
    %25 = vrot.lane.b32.xlu0 %v24, 96
    %v26 = vpop.permute.xlu0 %25
    %vm27 = vcmask 851712
    %28 = vst.msk [vmem:[#allocation0] sm:$0x1] %vm27, %v26
    %s29 = scalar_lea.vmem %s0, 11
    %v30 = vld [vmem:[%s29] sm:$0x1]
    %31 = vrot.lane.b32.xlu0 %v30, 88
    %v32 = vpop.permute.xlu0 %31
    %vm33 = vcmask 786112
    %34 = vst.msk [vmem:[#allocation0] sm:$0x1] %vm33, %v32
    %s35 = scalar_lea.vmem %s0, 10
    %v36 = vld [vmem:[%s35] sm:$0x1]
    %37 = vrot.lane.b32.xlu0 %v36, 80
    %v38 = vpop.permute.xlu0 %37
    %vm39 = vcmask 720512
    %40 = vst.msk [vmem:[#allocation0] sm:$0x1] %vm39, %v38
    %s41 = scalar_lea.vmem %s0, 9
    %v42 = vld [vmem:[%s41] sm:$0x1]
    %43 = vrot.lane.b32.xlu0 %v42, 72
    %v44 = vpop.permute.xlu0 %43
    %vm45 = vcmask 654912
    %46 = vst.msk [vmem:[#allocation0] sm:$0x1] %vm45, %v44
    %s47 = scalar_lea.vmem %s0, 8
    %v48 = vld [vmem:[%s47] sm:$0x1]
    %49 = vrot.lane.b32.xlu0 %v48, 64
    %v50 = vpop.permute.xlu0 %49
    %vm51 = vcmask 589312
    %52 = vst.msk [vmem:[#allocation0] sm:$0x1] %vm51, %v50
    %s53 = scalar_lea.vmem %s0, 7
    %v54 = vld [vmem:[%s53] sm:$0x1]
    %55 = vrot.lane.b32.xlu0 %v54, 56
    %v56 = vpop.permute.xlu0 %55
    %vm57 = vcmask 523712
    %58 = vst.msk [vmem:[#allocation0] sm:$0x1] %vm57, %v56
    %s59 = scalar_lea.vmem %s0, 6
    %v60 = vld [vmem:[%s59] sm:$0x1]
    %61 = vrot.lane.b32.xlu0 %v60, 48
    %v62 = vpop.permute.xlu0 %61
    %vm63 = vcmask 458112
    %64 = vst.msk [vmem:[#allocation0] sm:$0x1] %vm63, %v62
    %s65 = scalar_lea.vmem %s0, 5
    %v66 = vld [vmem:[%s65] sm:$0x1]
    %67 = vrot.lane.b32.xlu0 %v66, 40
    %v68 = vpop.permute.xlu0 %67
    %vm69 = vcmask 392512
    %70 = vst.msk [vmem:[#allocation0] sm:$0x1] %vm69, %v68
    %s71 = scalar_lea.vmem %s0, 4
    %v72 = vld [vmem:[%s71] sm:$0x1]
    %73 = vrot.lane.b32.xlu0 %v72, 32
    %v74 = vpop.permute.xlu0 %73
    %vm75 = vcmask 326912
    %76 = vst.msk [vmem:[#allocation0] sm:$0x1] %vm75, %v74
    %s77 = scalar_lea.vmem %s0, 3
    %v78 = vld [vmem:[%s77] sm:$0x1]
    %79 = vrot.lane.b32.xlu0 %v78, 24
    %v80 = vpop.permute.xlu0 %79
    %vm81 = vcmask 261312
    %82 = vst.msk [vmem:[#allocation0] sm:$0x1] %vm81, %v80
    %s83 = scalar_lea.vmem %s0, 2
    %v84 = vld [vmem:[%s83] sm:$0x1]
    %85 = vrot.lane.b32.xlu0 %v84, 16
    %v86 = vpop.permute.xlu0 %85
    %vm87 = vcmask 195712
    %88 = vst.msk [vmem:[#allocation0] sm:$0x1] %vm87, %v86
    %s89 = scalar_lea.vmem %s0, 1
    %v90 = vld [vmem:[%s89] sm:$0x1]
    %91 = vrot.lane.b32.xlu0 %v90, 8
    %v92 = vpop.permute.xlu0 %91
    %vm93 = vcmask 130112
    %94 = vst.msk [vmem:[#allocation0] sm:$0x1] %vm93, %v92
    %s96 = sshllo.u32 0, 1
    %v98 = vld [vmem:[#allocation0] sm:%s96]
    %s99 = sshllo.u32 0, 1
    %100 = vst [vmem:[%s1] sm:%s99] %v98

// kernel: sepconv_forward.2
$region0: #{sepconv_forward.2}
  #allocation0 [shape = 'u32[]', space=smem, size = 0x4, offset = 0x4, fixed_abs, tag = 'smem constant byte address 0x4 - core index']
  #allocation1 [shape = 'u32[144,128]{1,0:T(1,128)}', space=vmem, size = 0x12000, scoped, tag = 'internal scratch']
  %s0 = inlined_call_operand.vmem [shape: f32[2,18,128], index: 0, kind: input, shape index: {}]
  %s1 = inlined_call_operand.vmem [shape: f32[3,128,128], index: 1, kind: input, shape index: {}]
  %s2 = inlined_call_operand.vmem [shape: f32[2,16,128], index: 2, kind: output, shape index: {0}]
  %s3 = inlined_call_operand.vmem [shape: f32[2,1,2,128], index: 3, kind: output, shape index: {1}]
  %4 = xla_tuple %s2, %s3
  %s5 = sld [smem:[#allocation0]]
  $region49: #{sepconv_forward.2} parent=0
    _
  %s7 = ssub.s32 1, %s5
  %s8 = scalar_select 0, %s7, %s5
  loop: start=0, step=1, limit=4
  $region2: #{sepconv_forward.2} parent=0 // loop_pre_header
    _
  $region3: #{sepconv_forward.2} parent=0 // loop_header
    %s10 = sphi 0, %s14
    %p11 = scmp.ge.s32.totalorder %s10, 4
    %s17 = sphi 0, %s29
    %s18 = sphi 0, %s25
    %s19 = sphi 0, %s17
    %s20 = sphi 0, %s18
    %s21 = sphi 0, %s19
    %s22 = sphi 0, %s20
    %s32 = sphi 0, %s34
    %s35 = sphi 0, %s32
    %s36 = sphi 0, %s35
    %s52 = sphi 0, %s36
    %s56 = sphi 0, %s56
    %s58 = sphi 0, %s56
    %s59 = sphi 0, %s58
    %s73 = sphi 0, %s59
    %s81 = sphi 0, %s83
    %s84 = sphi 0, %s81
    %s85 = sphi 0, %s84
    %s101 = sphi 0, %s85
    %s109 = sphi 0, %s111
    %s112 = sphi 0, %s109
    %s113 = sphi 0, %s112
    %s129 = sphi 0, %s113
  $region4: #{sepconv_forward.2} parent=0 // loop_header_branch
    %13 = sbr.rel (%p11) target = $region8
  $region5: #{sepconv_forward.2} parent=0 // loop_body
    %s15 = ssub.s32 %s10, 1
    %s16 = ssub.s32 %s10, 2
    %s23 = sadd.s32 1, %s18
    %p24 = scmp.ge.s32.totalorder %s23, 1
    %s25 = scalar_select %p24, 0, %s23
    %s26 = sadd.s32 1, %s17
    %s27 = scalar_select %p24, %s26, %s17
    %p28 = scmp.ge.s32.totalorder %s27, 2
    %s29 = scalar_select %p28, 0, %s27
    %s30 = ssub.s32 %s17, %s29
    %p31 = scmp.eq.s32.totalorder %s30, 0
    %s33 = sadd.s32 %s32, 1
    %s34 = scalar_select %p31, %s32, %s33
    %p37 = pneg %p31
    %p38 = scmp.eq.s32.totalorder %s10, 1
    %p39 = por %p37, %p38
    %p40 = scmp.ne.s32.totalorder %s32, %s35
    %p41 = scmp.eq.s32.totalorder %s10, 0
    %p42 = por %p40, %p41
    %p43 = scmp.ne.s32.totalorder %s32, %s35
    %p44 = scmp.eq.s32.totalorder %s15, 1
    %p45 = por %p43, %p44
    %p46 = scmp.ne.s32.totalorder %s35, %s36
    %p47 = scmp.eq.s32.totalorder %s15, 0
    %p48 = por %p46, %p47
    %p49 = scmp.ne.s32.totalorder %s35, %s36
    %p50 = scmp.eq.s32.totalorder %s16, 1
    %p51 = por %p49, %p50
    %p53 = scmp.ne.s32.totalorder %s36, %s52
    %p54 = scmp.eq.s32.totalorder %s16, 0
    %p55 = por %p53, %p54
    %s57 = sadd.s32 %s56, 1
    %p60 = scmp.eq.s32.totalorder %s10, 1
    %p61 = scmp.ne.s32.totalorder %s56, %s58
    %p62 = scmp.eq.s32.totalorder %s10, 0
    %p63 = por %p61, %p62
    %p64 = scmp.ne.s32.totalorder %s56, %s58
    %p65 = scmp.eq.s32.totalorder %s15, 1
    %p66 = por %p64, %p65
    %p67 = scmp.ne.s32.totalorder %s58, %s59
    %p68 = scmp.eq.s32.totalorder %s15, 0
    %p69 = por %p67, %p68
    %p70 = scmp.ne.s32.totalorder %s58, %s59
    %p71 = scmp.eq.s32.totalorder %s16, 1
    %p72 = por %p70, %p71
    %p74 = scmp.ne.s32.totalorder %s59, %s73
    %p75 = scmp.eq.s32.totalorder %s16, 0
    %p76 = por %p74, %p75
    %s77 = ssub.s32 %s17, %s29
    %s78 = ssub.s32 %s18, %s25
    %s79 = sor.u32 %s77, %s78
    %p80 = scmp.eq.s32.totalorder %s79, 0
    %s82 = sadd.s32 %s81, 1
    %s83 = scalar_select %p80, %s81, %s82
    %p86 = pneg %p80
    %p87 = scmp.eq.s32.totalorder %s10, 1
    %p88 = por %p86, %p87
    %p89 = scmp.ne.s32.totalorder %s81, %s84
    %p90 = scmp.eq.s32.totalorder %s10, 0
    %p91 = por %p89, %p90
    %p92 = scmp.ne.s32.totalorder %s81, %s84
    %p93 = scmp.eq.s32.totalorder %s15, 1
    %p94 = por %p92, %p93
    %p95 = scmp.ne.s32.totalorder %s84, %s85
    %p96 = scmp.eq.s32.totalorder %s15, 0
    %p97 = por %p95, %p96
    %p98 = scmp.ne.s32.totalorder %s84, %s85
    %p99 = scmp.eq.s32.totalorder %s16, 1
    %p100 = por %p98, %p99
    %p102 = scmp.ne.s32.totalorder %s85, %s101
    %p103 = scmp.eq.s32.totalorder %s16, 0
    %p104 = por %p102, %p103
    %s105 = ssub.s32 %s17, %s29
    %s106 = ssub.s32 %s18, %s25
    %s107 = sor.u32 %s105, %s106
    %p108 = scmp.eq.s32.totalorder %s107, 0
    %s110 = sadd.s32 %s109, 1
    %s111 = scalar_select %p108, %s109, %s110
    %p114 = pneg %p108
    %p115 = scmp.eq.s32.totalorder %s10, 1
    %p116 = por %p114, %p115
    %p117 = scmp.ne.s32.totalorder %s109, %s112
    %p118 = scmp.eq.s32.totalorder %s10, 0
    %p119 = por %p117, %p118
    %p120 = scmp.ne.s32.totalorder %s109, %s112
    %p121 = scmp.eq.s32.totalorder %s15, 1
    %p122 = por %p120, %p121
    %p123 = scmp.ne.s32.totalorder %s112, %s113
    %p124 = scmp.eq.s32.totalorder %s15, 0
    %p125 = por %p123, %p124
    %p126 = scmp.ne.s32.totalorder %s112, %s113
    %p127 = scmp.eq.s32.totalorder %s16, 1
    %p128 = por %p126, %p127
    %p130 = scmp.ne.s32.totalorder %s113, %s129
    %p131 = scmp.eq.s32.totalorder %s16, 0
    %p132 = por %p130, %p131
    %p133 = scmp.le.s32.totalorder 1, %s10
    %p134 = scmp.lt.s32.totalorder %s10, 3
    %p135 = pnand %p133, %p134
    %p136 = pneg %p135
    // Predicated region
    $region9: #{sepconv_forward.2} parent=5 // pred_check
      _
    $region10: #{sepconv_forward.2} parent=5 // pred_check_branch
      %138 = sbr.rel (%p135) target = $region12
    $region11: #{sepconv_forward.2} parent=5 // pred_region
      %s139 = ssub.s32 %s10, 1
      // Predicated region
      $region13: #{sepconv_forward.2} parent=11 // pred_check
        %p140 = pneg %p69
      $region14: #{sepconv_forward.2} parent=11 // pred_check_branch
        %142 = sbr.rel (%p140) target = $region16
      $region15: #{sepconv_forward.2} parent=11 // pred_region
        _
      $region16: #{sepconv_forward.2} parent=11 // pred_fallthru
        _
    $region12: #{sepconv_forward.2} parent=5 // pred_fallthru
      _
    %p143 = scmp.lt.s32.totalorder %s10, 2
    // Predicated region
    $region17: #{sepconv_forward.2} parent=5 // pred_check
      %p144 = pneg %p143
    $region18: #{sepconv_forward.2} parent=5 // pred_check_branch
      %146 = sbr.rel (%p144) target = $region20
    $region19: #{sepconv_forward.2} parent=5 // pred_region
      // Predicated region
      $region21: #{sepconv_forward.2} parent=19 // pred_check
        %p147 = pneg %p42
      $region22: #{sepconv_forward.2} parent=19 // pred_check_branch
        %149 = sbr.rel (%p147) target = $region24
      $region23: #{sepconv_forward.2} parent=19 // pred_region
        %p150 = scmp.lt.s32.totalorder %s17, 1
        %s151 = scalar_select %p150, %s17, 1
        %s152 = smul.addr %s151, 3
        %s153 = smul.addr %s152, 8
        %s154 = scalar_lea.vmem %s0, %s153
      $region24: #{sepconv_forward.2} parent=19 // pred_fallthru
        _
    $region20: #{sepconv_forward.2} parent=5 // pred_fallthru
      _
    %p155 = scmp.le.s32.totalorder 1, %s10
    %p156 = scmp.lt.s32.totalorder %s10, 3
    %p157 = pnand %p155, %p156
    %p158 = pneg %p157
    // Predicated region
    $region25: #{sepconv_forward.2} parent=5 // pred_check
      _
    $region26: #{sepconv_forward.2} parent=5 // pred_check_branch
      %160 = sbr.rel (%p157) target = $region28
    $region27: #{sepconv_forward.2} parent=5 // pred_region
      %s161 = ssub.s32 %s10, 1
      %p162 = scmp.lt.s32.totalorder %s19, 1
      %s163 = scalar_select %p162, %s19, 1
      %s164 = smul.addr %s163, 3
      %s165 = smul.addr %s164, 8
      %s166 = scalar_lea.vmem %s0, %s165
      %p167 = pneg %p48
      %p168 = pneg %p45
      %p169 = pneg %p69
      %p170 = pneg %p66
      %p171 = pneg %p97
      %p172 = pneg %p94
      %s173 = smul.u32 2, %s20
      %p174 = scmp.lt.s32.totalorder %s19, 1
      %s175 = scalar_select %p174, %s19, 1
      %p176 = scmp.lt.s32.totalorder %s173, 1
      %s177 = scalar_select %p176, %s173, 1
      %s178 = smul.addr %s175, 2
      %s179 = sadd.s32 %s177, %s178
      %s180 = smul.addr %s179, 8
      %s181 = scalar_lea.vmem %s2, %s180
      %p182 = pneg %p125
      %p183 = pneg %p122
      %p184 = scmp.lt.s32.totalorder %s19, 1
      %s185 = scalar_select %p184, %s19, 1
      %p186 = scmp.lt.s32.totalorder %s20, 0
      %s187 = scalar_select %p186, %s20, 0
      %s188 = sadd.s32 %s187, %s185
      %s189 = smul.addr %s188, 2
      %s190 = scalar_lea.vmem %s3, %s189
      %p191 = scmp.lt.s32.totalorder %s19, 1
      %s192 = scalar_select %p191, %s19, 1
      %s193 = smul.addr %s192, 3
      %s194 = smul.addr %s193, 8
      %s195 = scalar_lea.vmem %s0, %s194
      %s196 = smul.u32 2, %s20
      %p197 = scmp.lt.s32.totalorder %s19, 1
      %s198 = scalar_select %p197, %s19, 1
      %p199 = scmp.lt.s32.totalorder %s196, 1
      %s200 = scalar_select %p199, %s196, 1
      %s201 = smul.addr %s198, 2
      %s202 = sadd.s32 %s200, %s201
      %s203 = smul.addr %s202, 8
      %s204 = scalar_lea.vmem %s2, %s203
      %s205 = smul.u32 2, %s20
      %p206 = scmp.lt.s32.totalorder %s19, 1
      %s207 = scalar_select %p206, %s19, 1
      %p208 = scmp.lt.s32.totalorder %s20, 0
      %s209 = scalar_select %p208, %s20, 0
      %s210 = sadd.s32 %s209, %s207
      %s211 = smul.addr %s210, 2
      %s212 = scalar_lea.vmem %s3, %s211
      %v213 = vld [vmem:[%s195] sm:$0xff]
      %v214 = vld [vmem:[%s195 + $0x8] sm:$0xff]
      %v215 = vld [vmem:[%s1] sm:$0xff]
      %v216 = vld [vmem:[%s1 + $0x8] sm:$0xff]
      %v217 = vld [vmem:[%s1 + $0x10] sm:$0xff]
      %v218 = vld [vmem:[%s1 + $0x18] sm:$0xff]
      %v219 = vld [vmem:[%s1 + $0x20] sm:$0xff]
      %v220 = vld [vmem:[%s1 + $0x28] sm:$0xff]
      %v221 = vld [vmem:[%s1 + $0x30] sm:$0xff]
      %v222 = vld [vmem:[%s1 + $0x38] sm:$0xff]
      %v223 = vld [vmem:[%s1 + $0x40] sm:$0xff]
      %v224 = vld [vmem:[%s1 + $0x48] sm:$0xff]
      %v225 = vld [vmem:[%s1 + $0x50] sm:$0xff]
      %v226 = vld [vmem:[%s1 + $0x58] sm:$0xff]
      %v227 = vld [vmem:[%s1 + $0x60] sm:$0xff]
      %v228 = vld [vmem:[%s1 + $0x68] sm:$0xff]
      %v229 = vld [vmem:[%s1 + $0x70] sm:$0xff]
      %v230 = vld [vmem:[%s1 + $0x78] sm:$0xff]
      %v231 = vld [vmem:[%s195 + $0x1] sm:$0xff]
      %v232 = vld [vmem:[%s195 + $0x9] sm:$0xff]
      %s233 = scalar_lea.vmem %s1, 128
      %v234 = vld [vmem:[%s233] sm:$0xff]
      %v235 = vld [vmem:[%s233 + $0x8] sm:$0xff]
      %v236 = vld [vmem:[%s233 + $0x10] sm:$0xff]
      %v237 = vld [vmem:[%s233 + $0x18] sm:$0xff]
      %v238 = vld [vmem:[%s233 + $0x20] sm:$0xff]
      %v239 = vld [vmem:[%s233 + $0x28] sm:$0xff]
      %v240 = vld [vmem:[%s233 + $0x30] sm:$0xff]
      %v241 = vld [vmem:[%s233 + $0x38] sm:$0xff]
      %v242 = vld [vmem:[%s233 + $0x40] sm:$0xff]
      %v243 = vld [vmem:[%s233 + $0x48] sm:$0xff]
      %v244 = vld [vmem:[%s233 + $0x50] sm:$0xff]
      %v245 = vld [vmem:[%s233 + $0x58] sm:$0xff]
      %v246 = vld [vmem:[%s233 + $0x60] sm:$0xff]
      %v247 = vld [vmem:[%s233 + $0x68] sm:$0xff]
      %v248 = vld [vmem:[%s233 + $0x70] sm:$0xff]
      %v249 = vld [vmem:[%s233 + $0x78] sm:$0xff]
      %250 = vmatprep.subr.mxu0 0.0
      %251 = vmatpush1.msra.mxu0 %v234
      %252 = vmatprep.subr.mxu0 0.0
      %253 = vmatpush1.msra.mxu0 %v235
      %254 = vmatprep.subr.mxu0 0.0
      %255 = vmatpush1.msra.mxu0 %v236
      %256 = vmatprep.subr.mxu0 0.0
      %257 = vmatpush1.msra.mxu0 %v237
      %258 = vmatprep.subr.mxu0 0.0
      %259 = vmatpush1.msra.mxu0 %v238
      %260 = vmatprep.subr.mxu0 0.0
      %261 = vmatpush1.msra.mxu0 %v239
      %262 = vmatprep.subr.mxu0 0.0
      %263 = vmatpush1.msra.mxu0 %v240
      %264 = vmatprep.subr.mxu0 0.0
      %265 = vmatpush1.msra.mxu0 %v241
      %266 = vmatprep.subr.mxu0 0.0
      %267 = vmatpush1.msra.mxu0 %v242
      %268 = vmatprep.subr.mxu0 0.0
      %269 = vmatpush1.msra.mxu0 %v243
      %270 = vmatprep.subr.mxu0 0.0
      %271 = vmatpush1.msra.mxu0 %v244
      %272 = vmatprep.subr.mxu0 0.0
      %273 = vmatpush1.msra.mxu0 %v245
      %274 = vmatprep.subr.mxu0 0.0
      %275 = vmatpush1.msra.mxu0 %v246
      %276 = vmatprep.subr.mxu0 0.0
      %277 = vmatpush1.msra.mxu0 %v247
      %278 = vmatprep.subr.mxu0 0.0
      %279 = vmatpush1.msra.mxu0 %v248
      %280 = vmatprep.subr.mxu0 0.0
      %281 = vmatpush1.msra.mxu0 %v249
      %282 = vmatprep.subr.mxu0 0.0
      %283 = vmatpush1.msra.mxu0 0.0
      %284 = vmatprep.subr.mxu0 0.0
      %285 = vmatpush1.msra.mxu0 0.0
      %286 = vmatprep.subr.mxu0 0.0
      %287 = vmatpush1.msra.mxu0 0.0
      %288 = vmatprep.subr.mxu0 0.0
      %289 = vmatpush1.msra.mxu0 0.0
      %290 = vmatprep.subr.mxu0 0.0
      %291 = vmatpush1.msra.mxu0 0.0
      %292 = vmatprep.subr.mxu0 0.0
      %293 = vmatpush1.msra.mxu0 0.0
      %294 = vmatprep.subr.mxu0 0.0
      %295 = vmatpush1.msra.mxu0 0.0
      %296 = vmatprep.subr.mxu0 0.0
      %297 = vmatpush1.msra.mxu0 0.0
      %298 = vmatprep.subr.mxu0 0.0
      %299 = vmatpush1.msra.mxu0 0.0
      %300 = vmatprep.subr.mxu0 0.0
      %301 = vmatpush1.msra.mxu0 0.0
      %302 = vmatprep.subr.mxu0 0.0
      %303 = vmatpush1.msra.mxu0 0.0
      %304 = vmatprep.subr.mxu0 0.0
      %305 = vmatpush1.msra.mxu0 0.0
      %306 = vmatprep.subr.mxu0 0.0
      %307 = vmatpush1.msra.mxu0 0.0
      %308 = vmatprep.subr.mxu0 0.0
      %309 = vmatpush1.msra.mxu0 0.0
      %310 = vmatprep.subr.mxu0 0.0
      %311 = vmatpush1.msra.mxu0 0.0
      %312 = vmatprep.subr.mxu0 0.0
      %313 = vmatpush1.msra.mxu0 0.0
      %314 = vmatprep.mubr.f32.mxu0 0.0
      %315 = vmatmul.mubr.f32.gmra.mrb[0].mxu0 %v231
      %v316 = vpop.f32.mrb[0].mxu0
      %v317 = vadd.f32 0.0, %v316
      %v318 = vpop.f32.mrb[0].mxu0
      %319 = vmatprep.mubr.f32.mxu0 0.0
      %320 = vmatmul.mubr.f32.gmra.mrb[0].mxu0 %v232
      %v321 = vpop.f32.mrb[0].mxu0
      %v322 = vadd.f32 0.0, %v321
      %v323 = vpop.f32.mrb[0].mxu0
      %324 = vdwg.mxu0
      %325 = vmatprep.subr.mxu0 0.0
      %326 = vmatpush1.msra.mxu0 %v215
      %327 = vmatprep.subr.mxu0 0.0
      %328 = vmatpush1.msra.mxu0 %v216
      %329 = vmatprep.subr.mxu0 0.0
      %330 = vmatpush1.msra.mxu0 %v217
      %331 = vmatprep.subr.mxu0 0.0
      %332 = vmatpush1.msra.mxu0 %v218
      %333 = vmatprep.subr.mxu0 0.0
      %334 = vmatpush1.msra.mxu0 %v219
      %335 = vmatprep.subr.mxu0 0.0
      %336 = vmatpush1.msra.mxu0 %v220
      %337 = vmatprep.subr.mxu0 0.0
      %338 = vmatpush1.msra.mxu0 %v221
      %339 = vmatprep.subr.mxu0 0.0
      %340 = vmatpush1.msra.mxu0 %v222
      %341 = vmatprep.subr.mxu0 0.0
      %342 = vmatpush1.msra.mxu0 %v223
      %343 = vmatprep.subr.mxu0 0.0
      %344 = vmatpush1.msra.mxu0 %v224
      %345 = vmatprep.subr.mxu0 0.0
      %346 = vmatpush1.msra.mxu0 %v225
      %347 = vmatprep.subr.mxu0 0.0
      %348 = vmatpush1.msra.mxu0 %v226
      %349 = vmatprep.subr.mxu0 0.0
      %350 = vmatpush1.msra.mxu0 %v227
      %351 = vmatprep.subr.mxu0 0.0
      %352 = vmatpush1.msra.mxu0 %v228
      %353 = vmatprep.subr.mxu0 0.0
      %354 = vmatpush1.msra.mxu0 %v229
      %355 = vmatprep.subr.mxu0 0.0
      %356 = vmatpush1.msra.mxu0 %v230
      %357 = vmatprep.subr.mxu0 0.0
      %358 = vmatpush1.msra.mxu0 0.0
      %359 = vmatprep.subr.mxu0 0.0
      %360 = vmatpush1.msra.mxu0 0.0
      %361 = vmatprep.subr.mxu0 0.0
      %362 = vmatpush1.msra.mxu0 0.0
      %363 = vmatprep.subr.mxu0 0.0
      %364 = vmatpush1.msra.mxu0 0.0
      %365 = vmatprep.subr.mxu0 0.0
      %366 = vmatpush1.msra.mxu0 0.0
      %367 = vmatprep.subr.mxu0 0.0
      %368 = vmatpush1.msra.mxu0 0.0
      %369 = vmatprep.subr.mxu0 0.0
      %370 = vmatpush1.msra.mxu0 0.0
      %371 = vmatprep.subr.mxu0 0.0
      %372 = vmatpush1.msra.mxu0 0.0
      %373 = vmatprep.subr.mxu0 0.0
      %374 = vmatpush1.msra.mxu0 0.0
      %375 = vmatprep.subr.mxu0 0.0
      %376 = vmatpush1.msra.mxu0 0.0
      %377 = vmatprep.subr.mxu0 0.0
      %378 = vmatpush1.msra.mxu0 0.0
      %379 = vmatprep.subr.mxu0 0.0
      %380 = vmatpush1.msra.mxu0 0.0
      %381 = vmatprep.subr.mxu0 0.0
      %382 = vmatpush1.msra.mxu0 0.0
      %383 = vmatprep.subr.mxu0 0.0
      %384 = vmatpush1.msra.mxu0 0.0
      %385 = vmatprep.subr.mxu0 0.0
      %386 = vmatpush1.msra.mxu0 0.0
      %387 = vmatprep.subr.mxu0 0.0
      %388 = vmatpush1.msra.mxu0 0.0
      %389 = vmatprep.mubr.f32.mxu0 0.0
      %390 = vmatmul.mubr.f32.gmra.mrb[0].mxu0 %v213
      %v391 = vpop.f32.mrb[0].mxu0
      %v392 = vadd.f32 %v317, %v391
      %v393 = vpop.f32.mrb[0].mxu0
      %394 = vmatprep.mubr.f32.mxu0 0.0
      %395 = vmatmul.mubr.f32.gmra.mrb[0].mxu0 %v214
      %v396 = vpop.f32.mrb[0].mxu0
      %v397 = vadd.f32 %v322, %v396
      %v398 = vpop.f32.mrb[0].mxu0
      %399 = vdwg.mxu0
      %v400 = vld [vmem:[%s195 + $0x2] sm:$0xff]
      %v401 = vld [vmem:[%s195 + $0xa] sm:$0xff]
      %s402 = scalar_lea.vmem %s1, 256
      %v403 = vld [vmem:[%s402] sm:$0xff]
      %v404 = vld [vmem:[%s402 + $0x8] sm:$0xff]
      %v405 = vld [vmem:[%s402 + $0x10] sm:$0xff]
      %v406 = vld [vmem:[%s402 + $0x18] sm:$0xff]
      %v407 = vld [vmem:[%s402 + $0x20] sm:$0xff]
      %v408 = vld [vmem:[%s402 + $0x28] sm:$0xff]
      %v409 = vld [vmem:[%s402 + $0x30] sm:$0xff]
      %v410 = vld [vmem:[%s402 + $0x38] sm:$0xff]
      %v411 = vld [vmem:[%s402 + $0x40] sm:$0xff]
      %v412 = vld [vmem:[%s402 + $0x48] sm:$0xff]
      %v413 = vld [vmem:[%s402 + $0x50] sm:$0xff]
      %v414 = vld [vmem:[%s402 + $0x58] sm:$0xff]
      %v415 = vld [vmem:[%s402 + $0x60] sm:$0xff]
      %v416 = vld [vmem:[%s402 + $0x68] sm:$0xff]
      %v417 = vld [vmem:[%s402 + $0x70] sm:$0xff]
      %v418 = vld [vmem:[%s402 + $0x78] sm:$0xff]
      %419 = vmatprep.subr.mxu0 0.0
      %420 = vmatpush1.msra.mxu0 %v403
      %421 = vmatprep.subr.mxu0 0.0
      %422 = vmatpush1.msra.mxu0 %v404
      %423 = vmatprep.subr.mxu0 0.0
      %424 = vmatpush1.msra.mxu0 %v405
      %425 = vmatprep.subr.mxu0 0.0
      %426 = vmatpush1.msra.mxu0 %v406
      %427 = vmatprep.subr.mxu0 0.0
      %428 = vmatpush1.msra.mxu0 %v407
      %429 = vmatprep.subr.mxu0 0.0
      %430 = vmatpush1.msra.mxu0 %v408
      %431 = vmatprep.subr.mxu0 0.0
      %432 = vmatpush1.msra.mxu0 %v409
      %433 = vmatprep.subr.mxu0 0.0
      %434 = vmatpush1.msra.mxu0 %v410
      %435 = vmatprep.subr.mxu0 0.0
      %436 = vmatpush1.msra.mxu0 %v411
      %437 = vmatprep.subr.mxu0 0.0
      %438 = vmatpush1.msra.mxu0 %v412
      %439 = vmatprep.subr.mxu0 0.0
      %440 = vmatpush1.msra.mxu0 %v413
      %441 = vmatprep.subr.mxu0 0.0
      %442 = vmatpush1.msra.mxu0 %v414
      %443 = vmatprep.subr.mxu0 0.0
      %444 = vmatpush1.msra.mxu0 %v415
      %445 = vmatprep.subr.mxu0 0.0
      %446 = vmatpush1.msra.mxu0 %v416
      %447 = vmatprep.subr.mxu0 0.0
      %448 = vmatpush1.msra.mxu0 %v417
      %449 = vmatprep.subr.mxu0 0.0
      %450 = vmatpush1.msra.mxu0 %v418
      %451 = vmatprep.subr.mxu0 0.0
      %452 = vmatpush1.msra.mxu0 0.0
      %453 = vmatprep.subr.mxu0 0.0
      %454 = vmatpush1.msra.mxu0 0.0
      %455 = vmatprep.subr.mxu0 0.0
      %456 = vmatpush1.msra.mxu0 0.0
      %457 = vmatprep.subr.mxu0 0.0
      %458 = vmatpush1.msra.mxu0 0.0
      %459 = vmatprep.subr.mxu0 0.0
      %460 = vmatpush1.msra.mxu0 0.0
      %461 = vmatprep.subr.mxu0 0.0
      %462 = vmatpush1.msra.mxu0 0.0
      %463 = vmatprep.subr.mxu0 0.0
      %464 = vmatpush1.msra.mxu0 0.0
      %465 = vmatprep.subr.mxu0 0.0
      %466 = vmatpush1.msra.mxu0 0.0
      %467 = vmatprep.subr.mxu0 0.0
      %468 = vmatpush1.msra.mxu0 0.0
      %469 = vmatprep.subr.mxu0 0.0
      %470 = vmatpush1.msra.mxu0 0.0
      %471 = vmatprep.subr.mxu0 0.0
      %472 = vmatpush1.msra.mxu0 0.0
      %473 = vmatprep.subr.mxu0 0.0
      %474 = vmatpush1.msra.mxu0 0.0
      %475 = vmatprep.subr.mxu0 0.0
      %476 = vmatpush1.msra.mxu0 0.0
      %477 = vmatprep.subr.mxu0 0.0
      %478 = vmatpush1.msra.mxu0 0.0
      %479 = vmatprep.subr.mxu0 0.0
      %480 = vmatpush1.msra.mxu0 0.0
      %481 = vmatprep.subr.mxu0 0.0
      %482 = vmatpush1.msra.mxu0 0.0
      %483 = vmatprep.mubr.f32.mxu0 0.0
      %484 = vmatmul.mubr.f32.gmra.mrb[0].mxu0 %v400
      %v485 = vpop.f32.mrb[0].mxu0
      %v486 = vadd.f32 0.0, %v485
      %v487 = vpop.f32.mrb[0].mxu0
      %488 = vmatprep.mubr.f32.mxu0 0.0
      %489 = vmatmul.mubr.f32.gmra.mrb[0].mxu0 %v401
      %v490 = vpop.f32.mrb[0].mxu0
      %v491 = vadd.f32 0.0, %v490
      %v492 = vpop.f32.mrb[0].mxu0
      %493 = vdwg.mxu0
      %v494 = vadd.f32 %v392, %v486
      %v495 = vadd.f32 %v397, %v491
      %496 = vst [vmem:[%s204] sm:$0xff] %v494
      %497 = vst [vmem:[%s204 + $0x8] sm:$0xff] %v495
      %v498 = vadd.f32 %v494, %v495
      %v499 = vrot.slane %v498, 4
      %v500 = vadd.f32 %v498, %v499
      %v501 = vrot.slane %v500, 2
      %v502 = vadd.f32 %v500, %v501
      %v503 = vrot.slane %v502, 1
      %v504 = vadd.f32 %v502, %v503
      %505 = vst [vmem:[%s212] sm:$0x1] %v504
      %v506 = vmul.f32 %v494, %v494
      %v507 = vmul.f32 %v495, %v495
      %v508 = vadd.f32 %v506, %v507
      %v509 = vrot.slane %v508, 4
      %v510 = vadd.f32 %v508, %v509
      %v511 = vrot.slane %v510, 2
      %v512 = vadd.f32 %v510, %v511
      %v513 = vrot.slane %v512, 1
      %v514 = vadd.f32 %v512, %v513
      %515 = vst [vmem:[%s212 + $0x1] sm:$0x1] %v514
      %s516 = smul.u32 2, %s20
      %p517 = scmp.lt.s32.totalorder %s19, 1
      %s518 = scalar_select %p517, %s19, 1
      %p519 = scmp.lt.s32.totalorder %s516, 1
      %s520 = scalar_select %p519, %s516, 1
      %s521 = smul.addr %s518, 2
      %s522 = sadd.s32 %s520, %s521
      %s523 = smul.addr %s522, 8
      %s524 = scalar_lea.vmem %s2, %s523
      %p525 = scmp.lt.s32.totalorder %s19, 1
      %s526 = scalar_select %p525, %s19, 1
      %p527 = scmp.lt.s32.totalorder %s20, 0
      %s528 = scalar_select %p527, %s20, 0
      %s529 = sadd.s32 %s528, %s526
      %s530 = smul.addr %s529, 2
      %s531 = scalar_lea.vmem %s3, %s530
      // Predicated region
      $region29: #{sepconv_forward.2} parent=27 // pred_check
        %p532 = pneg %p94
      $region30: #{sepconv_forward.2} parent=27 // pred_check_branch
        %534 = sbr.rel (%p532) target = $region32
      $region31: #{sepconv_forward.2} parent=27 // pred_region
        %s535 = smul.u32 2, %s20
      $region32: #{sepconv_forward.2} parent=27 // pred_fallthru
        _
      // Predicated region
      $region33: #{sepconv_forward.2} parent=27 // pred_check
        %p536 = pneg %p122
      $region34: #{sepconv_forward.2} parent=27 // pred_check_branch
        %538 = sbr.rel (%p536) target = $region36
      $region35: #{sepconv_forward.2} parent=27 // pred_region
        _
      $region36: #{sepconv_forward.2} parent=27 // pred_fallthru
        _
    $region28: #{sepconv_forward.2} parent=5 // pred_fallthru
      _
    %p539 = scmp.le.s32.totalorder 2, %s10
    // Predicated region
    $region37: #{sepconv_forward.2} parent=5 // pred_check
      %p540 = pneg %p539
    $region38: #{sepconv_forward.2} parent=5 // pred_check_branch
      %542 = sbr.rel (%p540) target = $region40
    $region39: #{sepconv_forward.2} parent=5 // pred_region
      %s543 = ssub.s32 %s10, 2
      // Predicated region
      $region41: #{sepconv_forward.2} parent=39 // pred_check
        %p544 = pneg %p100
      $region42: #{sepconv_forward.2} parent=39 // pred_check_branch
        %546 = sbr.rel (%p544) target = $region44
      $region43: #{sepconv_forward.2} parent=39 // pred_region
        %s547 = smul.u32 2, %s22
        %p548 = scmp.lt.s32.totalorder %s21, 1
        %s549 = scalar_select %p548, %s21, 1
        %p550 = scmp.lt.s32.totalorder %s547, 1
        %s551 = scalar_select %p550, %s547, 1
        %s552 = smul.addr %s549, 2
        %s553 = sadd.s32 %s551, %s552
        %s554 = smul.addr %s553, 8
        %s555 = scalar_lea.vmem %s2, %s554
      $region44: #{sepconv_forward.2} parent=39 // pred_fallthru
        _
      // Predicated region
      $region45: #{sepconv_forward.2} parent=39 // pred_check
        %p556 = pneg %p128
      $region46: #{sepconv_forward.2} parent=39 // pred_check_branch
        %558 = sbr.rel (%p556) target = $region48
      $region47: #{sepconv_forward.2} parent=39 // pred_region
        %p559 = scmp.lt.s32.totalorder %s21, 1
        %s560 = scalar_select %p559, %s21, 1
        %p561 = scmp.lt.s32.totalorder %s22, 0
        %s562 = scalar_select %p561, %s22, 0
        %s563 = sadd.s32 %s562, %s560
        %s564 = smul.addr %s563, 2
        %s565 = scalar_lea.vmem %s3, %s564
      $region48: #{sepconv_forward.2} parent=39 // pred_fallthru
        _
    $region40: #{sepconv_forward.2} parent=5 // pred_fallthru
      _
  $region6: #{sepconv_forward.2} parent=0 // loop_footer
    %s14 = sadd.s32 1, %s10
  $region7: #{sepconv_forward.2} parent=0 // loop_footer_branch
    %9 = sbr.rel target = $region3
  $region8: #{sepconv_forward.2} parent=0 // loop_exit
    _

// kernel: sepconv_forward.3
$region0: #{sepconv_forward.3}
  #allocation0 [shape = 'u32[]', space=smem, size = 0x4, offset = 0x4, fixed_abs, tag = 'smem constant byte address 0x4 - core index']
  #allocation1 [shape = 'u32[144,128]{1,0:T(1,128)}', space=vmem, size = 0x12000, scoped, tag = 'internal scratch']
  %s0 = inlined_call_operand.vmem [shape: f32[2,16,128], index: 0, kind: input, shape index: {}]
  %s1 = inlined_call_operand.vmem [shape: f32[1,1,128], index: 1, kind: input, shape index: {}]
  %s2 = inlined_call_operand.vmem [shape: f32[1,1,128], index: 2, kind: input, shape index: {}]
  %s3 = inlined_call_operand.vmem [shape: f32[2,16,128], index: 3, kind: output, shape index: {}]
  %s4 = sld [smem:[#allocation0]]
  $region45: #{sepconv_forward.3} parent=0
    _
  %s6 = ssub.s32 1, %s4
  %s7 = scalar_select 0, %s6, %s4
  loop: start=0, step=1, limit=4
  $region2: #{sepconv_forward.3} parent=0 // loop_pre_header
    _
  $region3: #{sepconv_forward.3} parent=0 // loop_header
    %s9 = sphi 0, %s13
    %p10 = scmp.ge.s32.totalorder %s9, 4
    %s16 = sphi 0, %s28
    %s17 = sphi 0, %s24
    %s18 = sphi 0, %s16
    %s19 = sphi 0, %s17
    %s20 = sphi 0, %s18
    %s21 = sphi 0, %s19
    %s33 = sphi 0, %s35
    %s36 = sphi 0, %s33
    %s37 = sphi 0, %s36
    %s53 = sphi 0, %s37
    %s57 = sphi 0, %s57
    %s59 = sphi 0, %s57
    %s60 = sphi 0, %s59
    %s74 = sphi 0, %s60
    %s78 = sphi 0, %s78
    %s80 = sphi 0, %s78
    %s81 = sphi 0, %s80
    %s95 = sphi 0, %s81
    %s103 = sphi 0, %s105
    %s106 = sphi 0, %s103
    %s107 = sphi 0, %s106
    %s123 = sphi 0, %s107
  $region4: #{sepconv_forward.3} parent=0 // loop_header_branch
    %12 = sbr.rel (%p10) target = $region8
  $region5: #{sepconv_forward.3} parent=0 // loop_body
    %s14 = ssub.s32 %s9, 1
    %s15 = ssub.s32 %s9, 2
    %s22 = sadd.s32 1, %s17
    %p23 = scmp.ge.s32.totalorder %s22, 1
    %s24 = scalar_select %p23, 0, %s22
    %s25 = sadd.s32 1, %s16
    %s26 = scalar_select %p23, %s25, %s16
    %p27 = scmp.ge.s32.totalorder %s26, 2
    %s28 = scalar_select %p27, 0, %s26
    %s29 = ssub.s32 %s16, %s28
    %s30 = ssub.s32 %s17, %s24
    %s31 = sor.u32 %s29, %s30
    %p32 = scmp.eq.s32.totalorder %s31, 0
    %s34 = sadd.s32 %s33, 1
    %s35 = scalar_select %p32, %s33, %s34
    %p38 = pneg %p32
    %p39 = scmp.eq.s32.totalorder %s9, 1
    %p40 = por %p38, %p39
    %p41 = scmp.ne.s32.totalorder %s33, %s36
    %p42 = scmp.eq.s32.totalorder %s9, 0
    %p43 = por %p41, %p42
    %p44 = scmp.ne.s32.totalorder %s33, %s36
    %p45 = scmp.eq.s32.totalorder %s14, 1
    %p46 = por %p44, %p45
    %p47 = scmp.ne.s32.totalorder %s36, %s37
    %p48 = scmp.eq.s32.totalorder %s14, 0
    %p49 = por %p47, %p48
    %p50 = scmp.ne.s32.totalorder %s36, %s37
    %p51 = scmp.eq.s32.totalorder %s15, 1
    %p52 = por %p50, %p51
    %p54 = scmp.ne.s32.totalorder %s37, %s53
    %p55 = scmp.eq.s32.totalorder %s15, 0
    %p56 = por %p54, %p55
    %s58 = sadd.s32 %s57, 1
    %p61 = scmp.eq.s32.totalorder %s9, 1
    %p62 = scmp.ne.s32.totalorder %s57, %s59
    %p63 = scmp.eq.s32.totalorder %s9, 0
    %p64 = por %p62, %p63
    %p65 = scmp.ne.s32.totalorder %s57, %s59
    %p66 = scmp.eq.s32.totalorder %s14, 1
    %p67 = por %p65, %p66
    %p68 = scmp.ne.s32.totalorder %s59, %s60
    %p69 = scmp.eq.s32.totalorder %s14, 0
    %p70 = por %p68, %p69
    %p71 = scmp.ne.s32.totalorder %s59, %s60
    %p72 = scmp.eq.s32.totalorder %s15, 1
    %p73 = por %p71, %p72
    %p75 = scmp.ne.s32.totalorder %s60, %s74
    %p76 = scmp.eq.s32.totalorder %s15, 0
    %p77 = por %p75, %p76
    %s79 = sadd.s32 %s78, 1
    %p82 = scmp.eq.s32.totalorder %s9, 1
    %p83 = scmp.ne.s32.totalorder %s78, %s80
    %p84 = scmp.eq.s32.totalorder %s9, 0
    %p85 = por %p83, %p84
    %p86 = scmp.ne.s32.totalorder %s78, %s80
    %p87 = scmp.eq.s32.totalorder %s14, 1
    %p88 = por %p86, %p87
    %p89 = scmp.ne.s32.totalorder %s80, %s81
    %p90 = scmp.eq.s32.totalorder %s14, 0
    %p91 = por %p89, %p90
    %p92 = scmp.ne.s32.totalorder %s80, %s81
    %p93 = scmp.eq.s32.totalorder %s15, 1
    %p94 = por %p92, %p93
    %p96 = scmp.ne.s32.totalorder %s81, %s95
    %p97 = scmp.eq.s32.totalorder %s15, 0
    %p98 = por %p96, %p97
    %s99 = ssub.s32 %s16, %s28
    %s100 = ssub.s32 %s17, %s24
    %s101 = sor.u32 %s99, %s100
    %p102 = scmp.eq.s32.totalorder %s101, 0
    %s104 = sadd.s32 %s103, 1
    %s105 = scalar_select %p102, %s103, %s104
    %p108 = pneg %p102
    %p109 = scmp.eq.s32.totalorder %s9, 1
    %p110 = por %p108, %p109
    %p111 = scmp.ne.s32.totalorder %s103, %s106
    %p112 = scmp.eq.s32.totalorder %s9, 0
    %p113 = por %p111, %p112
    %p114 = scmp.ne.s32.totalorder %s103, %s106
    %p115 = scmp.eq.s32.totalorder %s14, 1
    %p116 = por %p114, %p115
    %p117 = scmp.ne.s32.totalorder %s106, %s107
    %p118 = scmp.eq.s32.totalorder %s14, 0
    %p119 = por %p117, %p118
    %p120 = scmp.ne.s32.totalorder %s106, %s107
    %p121 = scmp.eq.s32.totalorder %s15, 1
    %p122 = por %p120, %p121
    %p124 = scmp.ne.s32.totalorder %s107, %s123
    %p125 = scmp.eq.s32.totalorder %s15, 0
    %p126 = por %p124, %p125
    %p127 = scmp.le.s32.totalorder 1, %s9
    %p128 = scmp.lt.s32.totalorder %s9, 3
    %p129 = pnand %p127, %p128
    %p130 = pneg %p129
    // Predicated region
    $region9: #{sepconv_forward.3} parent=5 // pred_check
      _
    $region10: #{sepconv_forward.3} parent=5 // pred_check_branch
      %132 = sbr.rel (%p129) target = $region12
    $region11: #{sepconv_forward.3} parent=5 // pred_region
      %s133 = ssub.s32 %s9, 1
      // Predicated region
      $region13: #{sepconv_forward.3} parent=11 // pred_check
        %p134 = pneg %p70
      $region14: #{sepconv_forward.3} parent=11 // pred_check_branch
        %136 = sbr.rel (%p134) target = $region16
      $region15: #{sepconv_forward.3} parent=11 // pred_region
        _
      $region16: #{sepconv_forward.3} parent=11 // pred_fallthru
        _
      // Predicated region
      $region17: #{sepconv_forward.3} parent=11 // pred_check
        %p137 = pneg %p91
      $region18: #{sepconv_forward.3} parent=11 // pred_check_branch
        %139 = sbr.rel (%p137) target = $region20
      $region19: #{sepconv_forward.3} parent=11 // pred_region
        _
      $region20: #{sepconv_forward.3} parent=11 // pred_fallthru
        _
    $region12: #{sepconv_forward.3} parent=5 // pred_fallthru
      _
    %p140 = scmp.lt.s32.totalorder %s9, 2
    // Predicated region
    $region21: #{sepconv_forward.3} parent=5 // pred_check
      %p141 = pneg %p140
    $region22: #{sepconv_forward.3} parent=5 // pred_check_branch
      %143 = sbr.rel (%p141) target = $region24
    $region23: #{sepconv_forward.3} parent=5 // pred_region
      // Predicated region
      $region25: #{sepconv_forward.3} parent=23 // pred_check
        %p144 = pneg %p43
      $region26: #{sepconv_forward.3} parent=23 // pred_check_branch
        %146 = sbr.rel (%p144) target = $region28
      $region27: #{sepconv_forward.3} parent=23 // pred_region
        %s147 = smul.u32 2, %s17
        %p148 = scmp.lt.s32.totalorder %s16, 1
        %s149 = scalar_select %p148, %s16, 1
        %p150 = scmp.lt.s32.totalorder %s147, 1
        %s151 = scalar_select %p150, %s147, 1
        %s152 = smul.addr %s149, 2
        %s153 = sadd.s32 %s151, %s152
        %s154 = smul.addr %s153, 8
        %s155 = scalar_lea.vmem %s0, %s154
        %s156 = smul.u32 2, %s17
      $region28: #{sepconv_forward.3} parent=23 // pred_fallthru
        _
    $region24: #{sepconv_forward.3} parent=5 // pred_fallthru
      _
    %p157 = scmp.le.s32.totalorder 1, %s9
    %p158 = scmp.lt.s32.totalorder %s9, 3
    %p159 = pnand %p157, %p158
    %p160 = pneg %p159
    // Predicated region
    $region29: #{sepconv_forward.3} parent=5 // pred_check
      _
    $region30: #{sepconv_forward.3} parent=5 // pred_check_branch
      %162 = sbr.rel (%p159) target = $region32
    $region31: #{sepconv_forward.3} parent=5 // pred_region
      %s163 = ssub.s32 %s9, 1
      %s164 = smul.u32 2, %s19
      %p165 = scmp.lt.s32.totalorder %s18, 1
      %s166 = scalar_select %p165, %s18, 1
      %p167 = scmp.lt.s32.totalorder %s164, 1
      %s168 = scalar_select %p167, %s164, 1
      %s169 = smul.addr %s166, 2
      %s170 = sadd.s32 %s168, %s169
      %s171 = smul.addr %s170, 8
      %s172 = scalar_lea.vmem %s0, %s171
      %p173 = pneg %p49
      %p174 = pneg %p46
      %p175 = pneg %p70
      %p176 = pneg %p67
      %p177 = pneg %p91
      %p178 = pneg %p88
      %p179 = pneg %p119
      %p180 = pneg %p116
      %s181 = smul.u32 2, %s19
      %p182 = scmp.lt.s32.totalorder %s18, 1
      %s183 = scalar_select %p182, %s18, 1
      %p184 = scmp.lt.s32.totalorder %s181, 1
      %s185 = scalar_select %p184, %s181, 1
      %s186 = smul.addr %s183, 2
      %s187 = sadd.s32 %s185, %s186
      %s188 = smul.addr %s187, 8
      %s189 = scalar_lea.vmem %s3, %s188
      %s190 = smul.u32 2, %s19
      %p191 = scmp.lt.s32.totalorder %s18, 1
      %s192 = scalar_select %p191, %s18, 1
      %p193 = scmp.lt.s32.totalorder %s190, 1
      %s194 = scalar_select %p193, %s190, 1
      %s195 = smul.addr %s192, 2
      %s196 = sadd.s32 %s194, %s195
      %s197 = smul.addr %s196, 8
      %s198 = scalar_lea.vmem %s0, %s197
      %s199 = smul.u32 2, %s19
      %s200 = smul.u32 2, %s19
      %p201 = scmp.lt.s32.totalorder %s18, 1
      %s202 = scalar_select %p201, %s18, 1
      %p203 = scmp.lt.s32.totalorder %s200, 1
      %s204 = scalar_select %p203, %s200, 1
      %s205 = smul.addr %s202, 2
      %s206 = sadd.s32 %s204, %s205
      %s207 = smul.addr %s206, 8
      %s208 = scalar_lea.vmem %s3, %s207
      %s209 = smul.u32 2, %s19
      %v210 = vld [vmem:[%s198] sm:$0xff]
      %v211 = vld [vmem:[%s198 + $0x8] sm:$0xff]
      %v212 = vld [vmem:[%s1] sm:$0x1]
      %v214 = vlaneseq
      %v215 = vshrl.u32 %v214, 7
      %v216 = vsub.s32 0, %v215
      %v217 = vrot.slane %v212, %v216
      %v219 = vmul.f32 %v210, %v217
      %v220 = vmul.f32 %v211, %v217
      %v221 = vld [vmem:[%s2] sm:$0x1]
      %v223 = vlaneseq
      %v224 = vshrl.u32 %v223, 7
      %v225 = vsub.s32 0, %v224
      %v226 = vrot.slane %v221, %v225
      %v228 = vadd.f32 %v219, %v226
      %v229 = vadd.f32 %v220, %v226
      %v230 = vsub.f32 %v228, 0.145
      %v231 = vsub.f32 %v229, 0.145
      %v232 = vmul.f32 %v230, 13.69863
      %v233 = vmul.f32 %v231, 13.69863
      %v234 = vmul.f32 %v232, 1.442695
      %v235 = vpow.pop %v234
      %v236 = vmul.f32 %v233, 1.442695
      %v237 = vpow.pop %v236
      %v238 = vadd.f32 %v235, 1.0
      %v239 = vadd.f32 %v237, 1.0
      %v240 = vrcp.pop %v238
      %v241 = vmul.f32 -0.945, %v240
      %v242 = vrcp.pop %v239
      %v243 = vmul.f32 -0.945, %v242
      %v244 = vadd.f32 %v241, 1.005
      %v245 = vadd.f32 %v243, 1.005
      %246 = vst [vmem:[%s208] sm:$0xff] %v244
      %247 = vst [vmem:[%s208 + $0x8] sm:$0xff] %v245
      %s248 = smul.u32 2, %s19
      %p249 = scmp.lt.s32.totalorder %s18, 1
      %s250 = scalar_select %p249, %s18, 1
      %p251 = scmp.lt.s32.totalorder %s248, 1
      %s252 = scalar_select %p251, %s248, 1
      %s253 = smul.addr %s250, 2
      %s254 = sadd.s32 %s252, %s253
      %s255 = smul.addr %s254, 8
      %s256 = scalar_lea.vmem %s3, %s255
      // Predicated region
      $region33: #{sepconv_forward.3} parent=31 // pred_check
        %p257 = pneg %p116
      $region34: #{sepconv_forward.3} parent=31 // pred_check_branch
        %259 = sbr.rel (%p257) target = $region36
      $region35: #{sepconv_forward.3} parent=31 // pred_region
        %s260 = smul.u32 2, %s19
      $region36: #{sepconv_forward.3} parent=31 // pred_fallthru
        _
    $region32: #{sepconv_forward.3} parent=5 // pred_fallthru
      _
    %p261 = scmp.le.s32.totalorder 2, %s9
    // Predicated region
    $region37: #{sepconv_forward.3} parent=5 // pred_check
      %p262 = pneg %p261
    $region38: #{sepconv_forward.3} parent=5 // pred_check_branch
      %264 = sbr.rel (%p262) target = $region40
    $region39: #{sepconv_forward.3} parent=5 // pred_region
      %s265 = ssub.s32 %s9, 2
      // Predicated region
      $region41: #{sepconv_forward.3} parent=39 // pred_check
        %p266 = pneg %p122
      $region42: #{sepconv_forward.3} parent=39 // pred_check_branch
        %268 = sbr.rel (%p266) target = $region44
      $region43: #{sepconv_forward.3} parent=39 // pred_region
        %s269 = smul.u32 2, %s21
        %p270 = scmp.lt.s32.totalorder %s20, 1
        %s271 = scalar_select %p270, %s20, 1
        %p272 = scmp.lt.s32.totalorder %s269, 1
        %s273 = scalar_select %p272, %s269, 1
        %s274 = smul.addr %s271, 2
        %s275 = sadd.s32 %s273, %s274
        %s276 = smul.addr %s275, 8
        %s277 = scalar_lea.vmem %s3, %s276
      $region44: #{sepconv_forward.3} parent=39 // pred_fallthru
        _
    $region40: #{sepconv_forward.3} parent=5 // pred_fallthru
      _
  $region6: #{sepconv_forward.3} parent=0 // loop_footer
    %s13 = sadd.s32 1, %s9
  $region7: #{sepconv_forward.3} parent=0 // loop_footer_branch
    %8 = sbr.rel target = $region3
  $region8: #{sepconv_forward.3} parent=0 // loop_exit
    _

</llo_original>
